<compile_context>
chip_gen: v5e
topology: v5e:2x2
jax: 0.10.0
libtpu: 0.0.40
codegen_flags: <defaults>
</compile_context>

<pallas_src>
import functools

import jax
import jax.numpy as jnp
import numpy as np
from jax.experimental import pallas as pl
from jax.experimental.pallas import tpu as pltpu

LN_EPS = 1e-5


def _round_up(v, m):
    return ((v + m - 1) // m) * m


def _vmem_capacity_bytes():
    """Per-core VMEM capacity; conservative 64 MiB (v7x) fallback if unknown."""
    try:
        info = pltpu.get_tpu_info()
        for attr in ("vmem_capacity_bytes", "vmem_bytes"):
            cap = getattr(info, attr, None)
            if cap:
                return int(cap)
    except Exception:
        pass
    return 64 * 1024 * 1024


def _gate_add_norm_kernel(x_ref, skip_ref, w_ref, b_ref, gamma_ref, beta_ref,
                          o_ref, *, h, hp):
    # x_ref:          (tile_rows, Din)   native dtype
    # skip_ref:       (tile_rows, H)     native dtype
    # w_ref:          (Din, 2*Hp)        [value half | gate half], native dtype
    # b_ref:          (1, 2*Hp)  f32     bias, same layout as w
    # gamma/beta_ref: (1, H)     f32     LayerNorm affine
    # o_ref:          (tile_rows, H)
    x = x_ref[...]
    # One fused MXU matmul (fills the 256-wide MXU on v6e/v7x), f32 accumulation.
    y = jnp.dot(x, w_ref[...], preferred_element_type=jnp.float32) + b_ref[...]
    # Value / gate split at a 128-aligned lane boundary (free).
    glu = y[:, :hp] * jax.nn.sigmoid(y[:, hp:])
    if hp != h:
        # H not 128-aligned (small-model / demo path): drop the zero-padded lanes so
        # LayerNorm statistics run over exactly H columns (no masking needed).
        glu = glu[:, :h]
    s = glu + skip_ref[...].astype(jnp.float32)            # trainable_add=False -> plain add

    inv_h = 1.0 / float(h)                                 # compile-time constant
    mean = jnp.sum(s, axis=-1, keepdims=True) * inv_h
    centered = s - mean
    var = jnp.sum(centered * centered, axis=-1, keepdims=True) * inv_h
    out = centered * jax.lax.rsqrt(var + LN_EPS) * gamma_ref[...] + beta_ref[...]
    o_ref[...] = out.astype(o_ref.dtype)


def _build_call(kernel, *, N, Din, H, Hp, tile_rows, grid_rows, out_dtype,
                vmem_limit, cost, single_buffer_consts):
    const_kw = dict(pipeline_mode=pl.Buffered(1)) if single_buffer_consts else {}
    in_specs = [
        pl.BlockSpec((tile_rows, Din), lambda i: (i, 0)),             # x rows
        pl.BlockSpec((tile_rows, H), lambda i: (i, 0)),               # skip rows
        pl.BlockSpec((Din, 2 * Hp), lambda i: (0, 0), **const_kw),    # fused GLU weight
        pl.BlockSpec((1, 2 * Hp), lambda i: (0, 0), **const_kw),      # fused GLU bias
        pl.BlockSpec((1, H), lambda i: (0, 0), **const_kw),           # LN gamma
        pl.BlockSpec((1, H), lambda i: (0, 0), **const_kw),           # LN beta
    ]
    return pl.pallas_call(
        kernel,
        out_shape=jax.ShapeDtypeStruct((N, H), out_dtype),
        grid_spec=pltpu.PrefetchScalarGridSpec(
            num_scalar_prefetch=0,
            grid=(grid_rows,),
            in_specs=in_specs,
            out_specs=pl.BlockSpec((tile_rows, H), lambda i: (i, 0)),
        ),
        compiler_params=pltpu.CompilerParams(
            dimension_semantics=("parallel",),
            vmem_limit_bytes=vmem_limit,
        ),
        cost_estimate=cost,
    )


def gate_add_norm(x, skip, w, b, gamma, beta, *, tile_rows=1024):
    """GLU(x) + skip -> LayerNorm.

    x: (B, T, Din), skip: (B, T, H), w: (Din, 2H) (pre-transposed torch weight),
    b: (2H,), gamma/beta: (H,).  Returns (B, T, H) in x.dtype.
    """
    B, T, Din = x.shape
    H = skip.shape[-1]
    assert w.shape == (Din, 2 * H)
    N = B * T
    act_bytes = jnp.dtype(x.dtype).itemsize
    skip_bytes = jnp.dtype(skip.dtype).itemsize

    # Only the GLU output halves need lane padding (so the value/gate split is a free
    # 128-aligned slice); activations stay at their true width (no HBM pad copies).
    Hp = _round_up(H, 128)

    # --- once-per-model parameter prep (tiny arrays; offline in a real model) -------
    w_dtype = x.dtype
    wa = w[:, :H].astype(w_dtype)
    wg = w[:, H:].astype(w_dtype)
    ba = b[:H].astype(jnp.float32)
    bg = b[H:].astype(jnp.float32)
    if Hp != H:
        wa = jnp.pad(wa, ((0, 0), (0, Hp - H)))
        wg = jnp.pad(wg, ((0, 0), (0, Hp - H)))
        ba = jnp.pad(ba, (0, Hp - H))
        bg = jnp.pad(bg, (0, Hp - H))
    w2 = jnp.concatenate([wa, wg], axis=1)                   # (Din, 2*Hp)
    b2 = jnp.concatenate([ba, bg]).reshape(1, 2 * Hp)        # (1, 2*Hp) f32
    g2 = gamma.astype(jnp.float32).reshape(1, H)
    be2 = beta.astype(jnp.float32).reshape(1, H)

    # --- generation-aware VMEM budgeting ---------------------------------------------
    vmem_cap = _vmem_capacity_bytes()
    budget = int(0.70 * vmem_cap)
    w_itemsize = jnp.dtype(w_dtype).itemsize
    # Conservative constant footprint (counts double buffers in case Buffered(1) is
    # unavailable on this jax version).
    const_bytes = 2 * (Din * 2 * Hp * w_itemsize + 2 * Hp * 4 + 2 * H * 4)
    if const_bytes > budget // 2:
        # TODO(synk): add an Hp-column weight-tiling path for very large hidden sizes.
        raise ValueError(
            f"GLU weight footprint ({const_bytes} B) exceeds the VMEM budget "
            f"({budget} B); resident-weight path only.")
    row_bytes = (2 * Din * act_bytes         # x tile, double-buffered
                 + 2 * H * skip_bytes        # skip tile, double-buffered
                 + 2 * H * act_bytes         # out tile, double-buffered
                 + 6 * Hp * 4)               # f32 intermediates (y/glu/s/centered/...)
    max_rows = max(8, (budget - const_bytes) // max(row_bytes, 1))

    tile_rows = int(min(tile_rows, max_rows))
    tile_rows = _round_up(max(tile_rows, 8), 8)
    if tile_rows >= N:
        tile_rows = N                         # single full-extent block (always legal)
    grid_rows = pl.cdiv(N, tile_rows)

    vmem_est = const_bytes + tile_rows * row_bytes
    vmem_ceiling = max(32 * 1024 * 1024, min(int(0.85 * vmem_cap), 112 * 1024 * 1024))
    vmem_limit = int(min(vmem_ceiling, max(32 * 1024 * 1024, 2 * vmem_est)))

    cost = pl.CostEstimate(
        flops=int(2 * N * Din * (2 * Hp) + 10 * N * H),
        transcendentals=int(N * Hp),
        bytes_accessed=int(N * Din * act_bytes + N * H * skip_bytes
                           + N * H * act_bytes + Din * 2 * Hp * w_itemsize),
    )

    kernel = functools.partial(_gate_add_norm_kernel, h=H, hp=Hp)
    x2 = x.reshape(N, Din)        # free reshape, no copy
    s2 = skip.reshape(N, H)
    args = (x2, s2, w2, b2, g2, be2)
    call_kwargs = dict(N=N, Din=Din, H=H, Hp=Hp, tile_rows=tile_rows,
                       grid_rows=grid_rows, out_dtype=x.dtype,
                       vmem_limit=vmem_limit, cost=cost)
    try:
        out = _build_call(kernel, single_buffer_consts=True, **call_kwargs)(*args)
    except Exception:
        # Fallback if this jax version rejects pipeline_mode=pl.Buffered(1) for the
        # constant-index operands: use default (double) buffering.
        out = _build_call(kernel, single_buffer_consts=False, **call_kwargs)(*args)

    return out.reshape(B, T, H)


def _reference(x, skip, w, b, gamma, beta):
    y = jnp.einsum("btd,dh->bth", x.astype(jnp.float32),
                   w.astype(jnp.float32)) + b.astype(jnp.float32)
    H = skip.shape[-1]
    glu = y[..., :H] * jax.nn.sigmoid(y[..., H:])
    s = glu + skip.astype(jnp.float32)
    mean = jnp.mean(s, axis=-1, keepdims=True)
    var = jnp.mean((s - mean) ** 2, axis=-1, keepdims=True)
    return (s - mean) * jax.lax.rsqrt(var + LN_EPS) * gamma + beta


def _make_params(key, input_size, hidden_size):
    kw, kb = jax.random.split(key)
    # GLU Linear: torch weight is (2H, Din); stored transposed as (Din, 2H).
    w = (jax.random.normal(kw, (input_size, 2 * hidden_size), dtype=jnp.float32)
         * (1.0 / np.sqrt(input_size)))
    b = jax.random.normal(kb, (2 * hidden_size,), dtype=jnp.float32) * 0.01
    gamma = jnp.ones((hidden_size,), dtype=jnp.float32)   # default torch LN init
    beta = jnp.zeros((hidden_size,), dtype=jnp.float32)
    return w, b, gamma, beta


if __name__ == "__main__":
    key = jax.random.PRNGKey(0)
    k1, k2, k3, k4 = jax.random.split(key, 4)

    # 1) Main check: f32, (batch, seq, input_size, hidden_size) = (2, 8, 32, 32).
    B, T, Din, H = 2, 8, 32, 32
    x = jax.random.normal(k1, (B, T, Din), dtype=jnp.float32)
    skip = jax.random.normal(k2, (B, T, H), dtype=jnp.float32)
    w, b, gamma, beta = _make_params(k3, Din, H)
    out = jax.block_until_ready(gate_add_norm(x, skip, w, b, gamma, beta))
    ref = _reference(x, skip, w, b, gamma, beta)
    np.testing.assert_allclose(np.asarray(out), np.asarray(ref), rtol=1e-5, atol=1e-5)

    # 2) Partial tail block: N = 2*13 = 26 rows with tile_rows=8 (grid of 4; the last
    #    block is partial, its garbage tail rows are write-dropped by the pipeline).
    Bt, Tt = 2, 13
    xt = jax.random.normal(k4, (Bt, Tt, Din), dtype=jnp.float32)
    st = jax.random.normal(k1, (Bt, Tt, H), dtype=jnp.float32)
    out_t = jax.block_until_ready(
        gate_add_norm(xt, st, w, b, gamma, beta, tile_rows=8))
    ref_t = _reference(xt, st, w, b, gamma, beta)
    np.testing.assert_allclose(np.asarray(out_t), np.asarray(ref_t),
                               rtol=1e-5, atol=1e-5)

    # 3) bf16 operands with a 128-aligned hidden size (no padded lanes anywhere).
    Din3, H3 = 64, 128
    x3 = jax.random.normal(k2, (B, T, Din3), dtype=jnp.float32).astype(jnp.bfloat16)
    s3 = jax.random.normal(k3, (B, T, H3), dtype=jnp.float32).astype(jnp.bfloat16)
    w3, b3, g3, be3 = _make_params(k4, Din3, H3)
    w3 = w3.astype(jnp.bfloat16)
    out3 = jax.block_until_ready(gate_add_norm(x3, s3, w3, b3, g3, be3))
    ref3 = _reference(x3, s3, w3, b3, g3, be3)
    np.testing.assert_allclose(np.asarray(out3.astype(jnp.float32)),
                               np.asarray(ref3), rtol=5e-2, atol=5e-2)

    print("KERNEL_OK")
</pallas_src>

<mosaic_0001>
module attributes {stable_mosaic.version = 11 : i64} {
  func.func @_gate_add_norm_kernel(%arg0: i32, %arg1: memref<16x32xf32, #tpu.memory_space<vmem>>, %arg2: memref<16x32xf32, #tpu.memory_space<vmem>>, %arg3: memref<32x256xf32, #tpu.memory_space<vmem>>, %arg4: memref<1x256xf32, #tpu.memory_space<vmem>>, %arg5: memref<1x32xf32, #tpu.memory_space<vmem>>, %arg6: memref<1x32xf32, #tpu.memory_space<vmem>>, %arg7: memref<16x32xf32, #tpu.memory_space<vmem>>) attributes {dimension_semantics = [#tpu.dimension_semantics<parallel>], iteration_bounds = array<i64: 1>, scalar_prefetch = 0 : i64, scratch_operands = 0 : i64, tpu.core_type = #tpu.core_type<tc>, window_params = [{transform_indices = @transform_0, window_bounds = array<i64: 16, 32>}, {transform_indices = @transform_1, window_bounds = array<i64: 16, 32>}, {pipeline_mode = #tpu.pipeline_mode<synchronous>, transform_indices = @transform_2, window_bounds = array<i64: 32, 256>}, {pipeline_mode = #tpu.pipeline_mode<synchronous>, transform_indices = @transform_3, window_bounds = array<i64: 1, 256>}, {pipeline_mode = #tpu.pipeline_mode<synchronous>, transform_indices = @transform_4, window_bounds = array<i64: 1, 32>}, {pipeline_mode = #tpu.pipeline_mode<synchronous>, transform_indices = @transform_5, window_bounds = array<i64: 1, 32>}, {transform_indices = @transform_6, window_bounds = array<i64: 16, 32>}]} {
    %c0 = arith.constant 0 : index
    %c0_0 = arith.constant 0 : index
    %0 = vector.load %arg1[%c0, %c0_0] : memref<16x32xf32, #tpu.memory_space<vmem>>, vector<16x32xf32>
    %c0_1 = arith.constant 0 : index
    %c0_2 = arith.constant 0 : index
    %1 = vector.load %arg3[%c0_1, %c0_2] : memref<32x256xf32, #tpu.memory_space<vmem>>, vector<32x256xf32>
    %cst = arith.constant dense<0.000000e+00> : vector<16x256xf32>
    %2 = tpu.matmul %0, %1, %cst {dimension_numbers = #tpu.dot_dimension_numbers<[1], [0], [0], [1], [0, 0, 1, 1], [], []>} : vector<16x32xf32>, vector<32x256xf32>, vector<16x256xf32> -> vector<16x256xf32>
    %c0_3 = arith.constant 0 : index
    %c0_4 = arith.constant 0 : index
    %3 = vector.load %arg4[%c0_3, %c0_4] : memref<1x256xf32, #tpu.memory_space<vmem>>, vector<1x256xf32>
    %4 = vector.broadcast %3 : vector<1x256xf32> to vector<16x256xf32>
    %5 = arith.addf %2, %4 : vector<16x256xf32>
    %6 = vector.extract_strided_slice %5 {offsets = [0, 0], sizes = [16, 128], strides = [1, 1]} : vector<16x256xf32> to vector<16x128xf32>
    %7 = vector.extract_strided_slice %5 {offsets = [0, 128], sizes = [16, 128], strides = [1, 1]} : vector<16x256xf32> to vector<16x128xf32>
    %8 = arith.negf %7 : vector<16x128xf32>
    %9 = math.exp %8 : vector<16x128xf32>
    %cst_5 = arith.constant 1.000000e+00 : f32
    %10 = vector.broadcast %cst_5 : f32 to vector<16x128xf32>
    %11 = arith.addf %10, %9 : vector<16x128xf32>
    %12 = arith.divf %10, %11 : vector<16x128xf32>
    %13 = arith.mulf %6, %12 : vector<16x128xf32>
    %14 = vector.extract_strided_slice %13 {offsets = [0, 0], sizes = [16, 32], strides = [1, 1]} : vector<16x128xf32> to vector<16x32xf32>
    %c0_6 = arith.constant 0 : index
    %c0_7 = arith.constant 0 : index
    %15 = vector.load %arg2[%c0_6, %c0_7] : memref<16x32xf32, #tpu.memory_space<vmem>>, vector<16x32xf32>
    %16 = arith.addf %14, %15 : vector<16x32xf32>
    %cst_8 = arith.constant dense<0.000000e+00> : vector<16xf32>
    %17 = vector.multi_reduction <add>, %16, %cst_8 [1] : vector<16x32xf32> to vector<16xf32>
    %18 = vector.shape_cast %17 : vector<16xf32> to vector<16x1xf32>
    %cst_9 = arith.constant 3.125000e-02 : f32
    %19 = vector.broadcast %cst_9 : f32 to vector<16x1xf32>
    %20 = arith.mulf %18, %19 : vector<16x1xf32>
    %21 = vector.broadcast %20 : vector<16x1xf32> to vector<16x32xf32>
    %22 = arith.subf %16, %21 : vector<16x32xf32>
    %23 = arith.mulf %22, %22 : vector<16x32xf32>
    %cst_10 = arith.constant dense<0.000000e+00> : vector<16xf32>
    %24 = vector.multi_reduction <add>, %23, %cst_10 [1] : vector<16x32xf32> to vector<16xf32>
    %25 = vector.shape_cast %24 : vector<16xf32> to vector<16x1xf32>
    %cst_11 = arith.constant 3.125000e-02 : f32
    %26 = vector.broadcast %cst_11 : f32 to vector<16x1xf32>
    %27 = arith.mulf %25, %26 : vector<16x1xf32>
    %cst_12 = arith.constant 9.99999974E-6 : f32
    %28 = vector.broadcast %cst_12 : f32 to vector<16x1xf32>
    %29 = arith.addf %27, %28 : vector<16x1xf32>
    %30 = math.rsqrt %29 : vector<16x1xf32>
    %31 = vector.broadcast %30 : vector<16x1xf32> to vector<16x32xf32>
    %32 = arith.mulf %22, %31 : vector<16x32xf32>
    %c0_13 = arith.constant 0 : index
    %c0_14 = arith.constant 0 : index
    %33 = vector.load %arg5[%c0_13, %c0_14] : memref<1x32xf32, #tpu.memory_space<vmem>>, vector<1x32xf32>
    %34 = vector.broadcast %33 : vector<1x32xf32> to vector<16x32xf32>
    %35 = arith.mulf %32, %34 : vector<16x32xf32>
    %c0_15 = arith.constant 0 : index
    %c0_16 = arith.constant 0 : index
    %36 = vector.load %arg6[%c0_15, %c0_16] : memref<1x32xf32, #tpu.memory_space<vmem>>, vector<1x32xf32>
    %37 = vector.broadcast %36 : vector<1x32xf32> to vector<16x32xf32>
    %38 = arith.addf %35, %37 : vector<16x32xf32>
    %c0_17 = arith.constant 0 : index
    %c0_18 = arith.constant 0 : index
    %39 = vector.load %arg7[%c0_17, %c0_18] : memref<16x32xf32, #tpu.memory_space<vmem>>, vector<16x32xf32>
    tpu.vector_store %arg7[%c0_17, %c0_18], %38 {strides = array<i32>} : memref<16x32xf32, #tpu.memory_space<vmem>>, vector<16x32xf32>,
    return
  }
  func.func @transform_0(%arg0: i32) -> (i32, i32) {
    %c0_i32 = arith.constant 0 : i32
    %c0_i32_0 = arith.constant 0 : i32
    return %arg0, %c0_i32 : i32, i32
  }
  func.func @transform_1(%arg0: i32) -> (i32, i32) {
    %c0_i32 = arith.constant 0 : i32
    %c0_i32_0 = arith.constant 0 : i32
    return %arg0, %c0_i32 : i32, i32
  }
  func.func @transform_2(%arg0: i32) -> (i32, i32) {
    %c0_i32 = arith.constant 0 : i32
    %c0_i32_0 = arith.constant 0 : i32
    %c0_i32_1 = arith.constant 0 : i32
    return %c0_i32, %c0_i32_0 : i32, i32
  }
  func.func @transform_3(%arg0: i32) -> (i32, i32) {
    %c0_i32 = arith.constant 0 : i32
    %c0_i32_0 = arith.constant 0 : i32
    %c0_i32_1 = arith.constant 0 : i32
    return %c0_i32, %c0_i32_0 : i32, i32
  }
  func.func @transform_4(%arg0: i32) -> (i32, i32) {
    %c0_i32 = arith.constant 0 : i32
    %c0_i32_0 = arith.constant 0 : i32
    %c0_i32_1 = arith.constant 0 : i32
    return %c0_i32, %c0_i32_0 : i32, i32
  }
  func.func @transform_5(%arg0: i32) -> (i32, i32) {
    %c0_i32 = arith.constant 0 : i32
    %c0_i32_0 = arith.constant 0 : i32
    %c0_i32_1 = arith.constant 0 : i32
    return %c0_i32, %c0_i32_0 : i32, i32
  }
  func.func @transform_6(%arg0: i32) -> (i32, i32) {
    %c0_i32 = arith.constant 0 : i32
    %c0_i32_0 = arith.constant 0 : i32
    return %arg0, %c0_i32 : i32, i32
  }
}

module attributes {stable_mosaic.version = 11 : i64} {
  func.func @_gate_add_norm_kernel(%arg0: i32, %arg1: memref<16x32xf32, #tpu.memory_space<vmem>>, %arg2: memref<16x32xf32, #tpu.memory_space<vmem>>, %arg3: memref<32x256xf32, #tpu.memory_space<vmem>>, %arg4: memref<1x256xf32, #tpu.memory_space<vmem>>, %arg5: memref<1x32xf32, #tpu.memory_space<vmem>>, %arg6: memref<1x32xf32, #tpu.memory_space<vmem>>, %arg7: memref<16x32xf32, #tpu.memory_space<vmem>>) attributes {dimension_semantics = [#tpu.dimension_semantics<parallel>], iteration_bounds = array<i64: 1>, scalar_prefetch = 0 : i64, scratch_operands = 0 : i64, tpu.core_type = #tpu.core_type<tc>, window_params = [{transform_indices = @transform_0, window_bounds = array<i64: 16, 32>}, {transform_indices = @transform_1, window_bounds = array<i64: 16, 32>}, {pipeline_mode = #tpu.pipeline_mode<synchronous>, transform_indices = @transform_2, window_bounds = array<i64: 32, 256>}, {pipeline_mode = #tpu.pipeline_mode<synchronous>, transform_indices = @transform_3, window_bounds = array<i64: 1, 256>}, {pipeline_mode = #tpu.pipeline_mode<synchronous>, transform_indices = @transform_4, window_bounds = array<i64: 1, 32>}, {pipeline_mode = #tpu.pipeline_mode<synchronous>, transform_indices = @transform_5, window_bounds = array<i64: 1, 32>}, {transform_indices = @transform_6, window_bounds = array<i64: 16, 32>}]} {
    %c0 = arith.constant 0 : index
    %c0_0 = arith.constant 0 : index
    %0 = vector.load %arg1[%c0, %c0_0] : memref<16x32xf32, #tpu.memory_space<vmem>>, vector<16x32xf32>
    %c0_1 = arith.constant 0 : index
    %c0_2 = arith.constant 0 : index
    %1 = vector.load %arg3[%c0_1, %c0_2] : memref<32x256xf32, #tpu.memory_space<vmem>>, vector<32x256xf32>
    %cst = arith.constant dense<0.000000e+00> : vector<16x256xf32>
    %2 = tpu.matmul %0, %1, %cst {dimension_numbers = #tpu.dot_dimension_numbers<[1], [0], [0], [1], [0, 0, 1, 1], [], []>} : vector<16x32xf32>, vector<32x256xf32>, vector<16x256xf32> -> vector<16x256xf32>
    %c0_3 = arith.constant 0 : index
    %c0_4 = arith.constant 0 : index
    %3 = vector.load %arg4[%c0_3, %c0_4] : memref<1x256xf32, #tpu.memory_space<vmem>>, vector<1x256xf32>
    %4 = vector.broadcast %3 : vector<1x256xf32> to vector<16x256xf32>
    %5 = arith.addf %2, %4 : vector<16x256xf32>
    %6 = vector.extract_strided_slice %5 {offsets = [0, 0], sizes = [16, 128], strides = [1, 1]} : vector<16x256xf32> to vector<16x128xf32>
    %7 = vector.extract_strided_slice %5 {offsets = [0, 128], sizes = [16, 128], strides = [1, 1]} : vector<16x256xf32> to vector<16x128xf32>
    %8 = arith.negf %7 : vector<16x128xf32>
    %9 = math.exp %8 : vector<16x128xf32>
    %cst_5 = arith.constant 1.000000e+00 : f32
    %10 = vector.broadcast %cst_5 : f32 to vector<16x128xf32>
    %11 = arith.addf %10, %9 : vector<16x128xf32>
    %12 = arith.divf %10, %11 : vector<16x128xf32>
    %13 = arith.mulf %6, %12 : vector<16x128xf32>
    %14 = vector.extract_strided_slice %13 {offsets = [0, 0], sizes = [16, 32], strides = [1, 1]} : vector<16x128xf32> to vector<16x32xf32>
    %c0_6 = arith.constant 0 : index
    %c0_7 = arith.constant 0 : index
    %15 = vector.load %arg2[%c0_6, %c0_7] : memref<16x32xf32, #tpu.memory_space<vmem>>, vector<16x32xf32>
    %16 = arith.addf %14, %15 : vector<16x32xf32>
    %cst_8 = arith.constant dense<0.000000e+00> : vector<16xf32>
    %17 = vector.multi_reduction <add>, %16, %cst_8 [1] : vector<16x32xf32> to vector<16xf32>
    %18 = vector.shape_cast %17 : vector<16xf32> to vector<16x1xf32>
    %cst_9 = arith.constant 3.125000e-02 : f32
    %19 = vector.broadcast %cst_9 : f32 to vector<16x1xf32>
    %20 = arith.mulf %18, %19 : vector<16x1xf32>
    %21 = vector.broadcast %20 : vector<16x1xf32> to vector<16x32xf32>
    %22 = arith.subf %16, %21 : vector<16x32xf32>
    %23 = arith.mulf %22, %22 : vector<16x32xf32>
    %cst_10 = arith.constant dense<0.000000e+00> : vector<16xf32>
    %24 = vector.multi_reduction <add>, %23, %cst_10 [1] : vector<16x32xf32> to vector<16xf32>
    %25 = vector.shape_cast %24 : vector<16xf32> to vector<16x1xf32>
    %cst_11 = arith.constant 3.125000e-02 : f32
    %26 = vector.broadcast %cst_11 : f32 to vector<16x1xf32>
    %27 = arith.mulf %25, %26 : vector<16x1xf32>
    %cst_12 = arith.constant 9.99999974E-6 : f32
    %28 = vector.broadcast %cst_12 : f32 to vector<16x1xf32>
    %29 = arith.addf %27, %28 : vector<16x1xf32>
    %30 = math.rsqrt %29 : vector<16x1xf32>
    %31 = vector.broadcast %30 : vector<16x1xf32> to vector<16x32xf32>
    %32 = arith.mulf %22, %31 : vector<16x32xf32>
    %c0_13 = arith.constant 0 : index
    %c0_14 = arith.constant 0 : index
    %33 = vector.load %arg5[%c0_13, %c0_14] : memref<1x32xf32, #tpu.memory_space<vmem>>, vector<1x32xf32>
    %34 = vector.broadcast %33 : vector<1x32xf32> to vector<16x32xf32>
    %35 = arith.mulf %32, %34 : vector<16x32xf32>
    %c0_15 = arith.constant 0 : index
    %c0_16 = arith.constant 0 : index
    %36 = vector.load %arg6[%c0_15, %c0_16] : memref<1x32xf32, #tpu.memory_space<vmem>>, vector<1x32xf32>
    %37 = vector.broadcast %36 : vector<1x32xf32> to vector<16x32xf32>
    %38 = arith.addf %35, %37 : vector<16x32xf32>
    %c0_17 = arith.constant 0 : index
    %c0_18 = arith.constant 0 : index
    %39 = vector.load %arg7[%c0_17, %c0_18] : memref<16x32xf32, #tpu.memory_space<vmem>>, vector<16x32xf32>
    tpu.vector_store %arg7[%c0_17, %c0_18], %38 {strides = array<i32>} : memref<16x32xf32, #tpu.memory_space<vmem>>, vector<16x32xf32>,
    return
  }
  func.func @transform_0(%arg0: i32) -> (i32, i32) {
    %c0_i32 = arith.constant 0 : i32
    %c0_i32_0 = arith.constant 0 : i32
    return %arg0, %c0_i32 : i32, i32
  }
  func.func @transform_1(%arg0: i32) -> (i32, i32) {
    %c0_i32 = arith.constant 0 : i32
    %c0_i32_0 = arith.constant 0 : i32
    return %arg0, %c0_i32 : i32, i32
  }
  func.func @transform_2(%arg0: i32) -> (i32, i32) {
    %c0_i32 = arith.constant 0 : i32
    %c0_i32_0 = arith.constant 0 : i32
    %c0_i32_1 = arith.constant 0 : i32
    return %c0_i32, %c0_i32_0 : i32, i32
  }
  func.func @transform_3(%arg0: i32) -> (i32, i32) {
    %c0_i32 = arith.constant 0 : i32
    %c0_i32_0 = arith.constant 0 : i32
    %c0_i32_1 = arith.constant 0 : i32
    return %c0_i32, %c0_i32_0 : i32, i32
  }
  func.func @transform_4(%arg0: i32) -> (i32, i32) {
    %c0_i32 = arith.constant 0 : i32
    %c0_i32_0 = arith.constant 0 : i32
    %c0_i32_1 = arith.constant 0 : i32
    return %c0_i32, %c0_i32_0 : i32, i32
  }
  func.func @transform_5(%arg0: i32) -> (i32, i32) {
    %c0_i32 = arith.constant 0 : i32
    %c0_i32_0 = arith.constant 0 : i32
    %c0_i32_1 = arith.constant 0 : i32
    return %c0_i32, %c0_i32_0 : i32, i32
  }
  func.func @transform_6(%arg0: i32) -> (i32, i32) {
    %c0_i32 = arith.constant 0 : i32
    %c0_i32_0 = arith.constant 0 : i32
    return %arg0, %c0_i32 : i32, i32
  }
}

</mosaic_0001>

<llo_original>
// kernel: tpu_custom_call.1
$region0: #{tpu_custom_call.1}
  #allocation0 [shape = 'u32[]', space=smem, size = 0x4, offset = 0x4, fixed_abs, tag = 'smem constant byte address 0x4 - core index']
  #allocation1 [shape = 'u32[72,128]{1,0:T(1,128)}', space=vmem, size = 0x9000, scoped, tag = 'internal scratch']
  %s0 = inlined_call_operand.hbm [shape: f32[16,32], index: 0, kind: input, shape index: {}]
  %s1 = inlined_call_operand.hbm [shape: f32[16,32], index: 1, kind: input, shape index: {}]
  %s2 = inlined_call_operand.hbm [shape: f32[32,256], index: 2, kind: input, shape index: {}]
  %s3 = inlined_call_operand.vmem [shape: f32[1,256], index: 3, kind: input, shape index: {}]
  %s4 = inlined_call_operand.vmem [shape: f32[1,32], index: 4, kind: input, shape index: {}]
  %s5 = inlined_call_operand.vmem [shape: f32[1,32], index: 5, kind: input, shape index: {}]
  %s6 = inlined_call_operand.hbm [shape: f32[16,32], index: 6, kind: output, shape index: {}]
  %s7 = sld [smem:[#allocation0]]
  $region46: #{tpu_custom_call.1} parent=0
    _
  %s9 = ssub.s32 1, %s7
  %s10 = scalar_select 0, %s9, %s7
  $region1: #{tpu_custom_call.1} parent=0
    #allocation2 [shape = 'u8[8192]{0}', space=vmem, size = 0x2000, scoped, tag = 'input window, operand 0, single buffered']
    #allocation3 [shape = 's32[1]{0}', space=sflag, size = 0x4, scoped, tag = 'scoped memory for tpu_custom_call.1']
    #allocation4 [shape = 's32[1]{0}', space=sflag, size = 0x4, scoped, tag = 'scoped memory for tpu_custom_call.1']
    #allocation5 [shape = 'u8[8192]{0}', space=vmem, size = 0x2000, scoped, tag = 'input window, operand 1, single buffered']
    #allocation6 [shape = 's32[1]{0}', space=sflag, size = 0x4, scoped, tag = 'scoped memory for tpu_custom_call.1']
    #allocation7 [shape = 'u8[32768]{0}', space=vmem, size = 0x8000, scoped, tag = 'input window, operand 2, single buffered']
    #allocation8 [shape = 'u8[8192]{0}', space=vmem, size = 0x2000, scoped, tag = 'output window, operand 0, single buffered']
    %11 = vsyncpa [#allocation3], 0
    %12 = vsyncpa [#allocation6], 0
    %13 = vsyncpa [#allocation4], 0
    // Predicated region
    $region2: #{tpu_custom_call.1} parent=1 // pred_check
      _
    $region3: #{tpu_custom_call.1} parent=1 // pred_check_branch
      %15 = sbr.rel (0) target = $region5
    $region4: #{tpu_custom_call.1} parent=1 // pred_region
      %17 = vsyncadd [#allocation3], 0
      %s18 = sshll.u32 %s0, 4
      %s19 = int_to_ptr.hbm [resolvable:$true] %s18
      %s20 = sshll.u32 [#allocation2], 4
      %s21 = int_to_ptr.vmem [resolvable:$true] %s20
      %26 = dma.hbm_to_vmem [thread:$0]  %s19, 256, %s21, [#allocation3], 128, 128, 8
    $region5: #{tpu_custom_call.1} parent=1 // pred_fallthru
      _
    // Predicated region
    $region6: #{tpu_custom_call.1} parent=1 // pred_check
      _
    $region7: #{tpu_custom_call.1} parent=1 // pred_check_branch
      %28 = sbr.rel (0) target = $region9
    $region8: #{tpu_custom_call.1} parent=1 // pred_region
      %30 = vsyncadd [#allocation6], 0
      %s31 = sshll.u32 %s1, 4
      %s32 = int_to_ptr.hbm [resolvable:$true] %s31
      %s33 = sshll.u32 [#allocation5], 4
      %s34 = int_to_ptr.vmem [resolvable:$true] %s33
      %39 = dma.hbm_to_vmem [thread:$0]  %s32, 256, %s34, [#allocation6], 128, 128, 8
    $region9: #{tpu_custom_call.1} parent=1 // pred_fallthru
      _
    // Predicated region
    $region10: #{tpu_custom_call.1} parent=1 // pred_check
      _
    $region11: #{tpu_custom_call.1} parent=1 // pred_check_branch
      %41 = sbr.rel (0) target = $region13
    $region12: #{tpu_custom_call.1} parent=1 // pred_region
      %43 = vsyncadd [#allocation6], 0
      %s44 = sshll.u32 %s2, 4
      %s45 = int_to_ptr.hbm [resolvable:$true] %s44
      %s46 = sshll.u32 [#allocation7], 4
      %s47 = int_to_ptr.vmem [resolvable:$true] %s46
      %52 = dma.hbm_to_vmem [thread:$0]  %s45, 1024, %s47, [#allocation6], 256, 256, 16
    $region13: #{tpu_custom_call.1} parent=1 // pred_fallthru
      _
    // Predicated region
    $region14: #{tpu_custom_call.1} parent=1 // pred_check
      _
    $region15: #{tpu_custom_call.1} parent=1 // pred_check_branch
      %54 = sbr.rel (0) target = $region17
    $region16: #{tpu_custom_call.1} parent=1 // pred_region
      _
    $region17: #{tpu_custom_call.1} parent=1 // pred_fallthru
      _
    // Predicated region
    $region18: #{tpu_custom_call.1} parent=1 // pred_check
      _
    $region19: #{tpu_custom_call.1} parent=1 // pred_check_branch
      %56 = sbr.rel (0) target = $region21
    $region20: #{tpu_custom_call.1} parent=1 // pred_region
      _
    $region21: #{tpu_custom_call.1} parent=1 // pred_fallthru
      _
    // Predicated region
    $region22: #{tpu_custom_call.1} parent=1 // pred_check
      _
    $region23: #{tpu_custom_call.1} parent=1 // pred_check_branch
      %58 = sbr.rel (0) target = $region25
    $region24: #{tpu_custom_call.1} parent=1 // pred_region
      _
    $region25: #{tpu_custom_call.1} parent=1 // pred_fallthru
      _
    // Predicated region
    $region26: #{tpu_custom_call.1} parent=1 // pred_check
      _
    $region27: #{tpu_custom_call.1} parent=1 // pred_check_branch
      %60 = sbr.rel (0) target = $region29
    $region28: #{tpu_custom_call.1} parent=1 // pred_region
      %62 = dma.done [#allocation3], 256
    $region29: #{tpu_custom_call.1} parent=1 // pred_fallthru
      _
    // Predicated region
    $region30: #{tpu_custom_call.1} parent=1 // pred_check
      _
    $region31: #{tpu_custom_call.1} parent=1 // pred_check_branch
      %64 = sbr.rel (0) target = $region33
    $region32: #{tpu_custom_call.1} parent=1 // pred_region
      %66 = dma.done [#allocation6], 256
    $region33: #{tpu_custom_call.1} parent=1 // pred_fallthru
      _
    // Predicated region
    $region34: #{tpu_custom_call.1} parent=1 // pred_check
      _
    $region35: #{tpu_custom_call.1} parent=1 // pred_check_branch
      %68 = sbr.rel (0) target = $region37
    $region36: #{tpu_custom_call.1} parent=1 // pred_region
      %70 = dma.done [#allocation6], 1024
    $region37: #{tpu_custom_call.1} parent=1 // pred_fallthru
      _
    %v71 = vld [vmem:[#allocation2] sm:$0xff]
    %v72 = vld [vmem:[#allocation2 + $0x8] sm:$0xff]
    %v73 = vld [vmem:[#allocation7] sm:$0xff]
    %v74 = vld [vmem:[#allocation7 + $0x8] sm:$0xff]
    %v75 = vld [vmem:[#allocation7 + $0x10] sm:$0xff]
    %v76 = vld [vmem:[#allocation7 + $0x18] sm:$0xff]
    %v77 = vld [vmem:[#allocation7 + $0x20] sm:$0xff]
    %v78 = vld [vmem:[#allocation7 + $0x28] sm:$0xff]
    %v79 = vld [vmem:[#allocation7 + $0x30] sm:$0xff]
    %v80 = vld [vmem:[#allocation7 + $0x38] sm:$0xff]
    %v81 = vld [vmem:[%s3] sm:$0x3]
    %v83 = vperm.slane %v81, 0
    %v84 = vperm.slane %v81, 1
    %vm87 = vcmask 261120
    %v89 = vsel %vm87, %v71, 0
    %v92 = vsel %vm87, %v72, 0
    %94 = vmatpush.msra.mxu0 0.0
    %95 = vmatpush.msra.mxu0 0.0
    %96 = vmatpush.msra.mxu0 0.0
    %97 = vmatpush.msra.mxu0 0.0
    %98 = vmatpush.msra.mxu0 0.0
    %99 = vmatpush.msra.mxu0 0.0
    %100 = vmatpush.msra.mxu0 0.0
    %101 = vmatpush.msra.mxu0 0.0
    %102 = vmatpush.msra.mxu0 0.0
    %103 = vmatpush.msra.mxu0 0.0
    %104 = vmatpush.msra.mxu0 0.0
    %105 = vmatpush.msra.mxu0 0.0
    %106 = vmatpush.msra.mxu0 %v79
    %107 = vmatpush.msra.mxu0 %v77
    %108 = vmatpush.msra.mxu0 %v75
    %109 = vmatpush.msra.mxu0 %v73
    %110 = vmatmul.f32.gmra.mxu0 %v89
    %v111 = vpop.f32.mrf.mxu0
    %v112 = vadd.f32 %v83, %v111
    %113 = vmatmul.f32.gmra.mxu0 %v92
    %v114 = vpop.f32.mrf.mxu0
    %v115 = vadd.f32 %v83, %v114
    %116 = vdwg.mxu0
    %117 = vmatpush.msra.mxu0 0.0
    %118 = vmatpush.msra.mxu0 0.0
    %119 = vmatpush.msra.mxu0 0.0
    %120 = vmatpush.msra.mxu0 0.0
    %121 = vmatpush.msra.mxu0 0.0
    %122 = vmatpush.msra.mxu0 0.0
    %123 = vmatpush.msra.mxu0 0.0
    %124 = vmatpush.msra.mxu0 0.0
    %125 = vmatpush.msra.mxu0 0.0
    %126 = vmatpush.msra.mxu0 0.0
    %127 = vmatpush.msra.mxu0 0.0
    %128 = vmatpush.msra.mxu0 0.0
    %129 = vmatpush.msra.mxu0 %v80
    %130 = vmatpush.msra.mxu0 %v78
    %131 = vmatpush.msra.mxu0 %v76
    %132 = vmatpush.msra.mxu0 %v74
    %133 = vmatmul.f32.gmra.mxu0 %v89
    %v134 = vpop.f32.mrf.mxu0
    %v135 = vadd.f32 %v84, %v134
    %136 = vmatmul.f32.gmra.mxu0 %v92
    %v137 = vpop.f32.mrf.mxu0
    %v138 = vadd.f32 %v84, %v137
    %139 = vdwg.mxu0
    %v140 = vxor.u32 %v135, 2147483648
    %v141 = vxor.u32 %v138, 2147483648
    %v142 = vmul.f32 %v140, 1.442695
    %v143 = vpow.pop %v142
    %v144 = vmul.f32 %v141, 1.442695
    %v145 = vpow.pop %v144
    %v146 = vadd.f32 %v143, 1.0
    %v147 = vadd.f32 %v145, 1.0
    %v148 = vrcp.pop %v146
    %v149 = vmul.f32 %v146, %v148
    %v150 = vsub.f32 1.0, %v149
    %v151 = vmul.f32 %v148, %v150
    %v152 = vadd.f32 %v148, %v151
    %vm153 = vweird.f32 %v146
    %vm154 = vweird.f32 %v148
    %vm155 = vmor %vm153, %vm154
    %v156 = vsel %vm155, %v148, %v152
    %v157 = vand.u32 2147483647, %v146
    %vm158 = vcmp.eq.f32.partialorder %v157, 8.507059e+37
    %v159 = vand.u32 %v146, 2147483648
    %v160 = vor.u32 1.1754944e-38, %v159
    %v161 = vsel %vm158, %v160, %v156
    %v162 = vmul.f32 1.0, %v161
    %v163 = vrcp.pop %v147
    %v164 = vmul.f32 %v147, %v163
    %v165 = vsub.f32 1.0, %v164
    %v166 = vmul.f32 %v163, %v165
    %v167 = vadd.f32 %v163, %v166
    %vm168 = vweird.f32 %v147
    %vm169 = vweird.f32 %v163
    %vm170 = vmor %vm168, %vm169
    %v171 = vsel %vm170, %v163, %v167
    %v172 = vand.u32 2147483647, %v147
    %vm173 = vcmp.eq.f32.partialorder %v172, 8.507059e+37
    %v174 = vand.u32 %v147, 2147483648
    %v175 = vor.u32 1.1754944e-38, %v174
    %v176 = vsel %vm173, %v175, %v171
    %v177 = vmul.f32 1.0, %v176
    %v178 = vmul.f32 %v112, %v162
    %v179 = vmul.f32 %v115, %v177
    %v180 = vld [vmem:[#allocation5] sm:$0xff]
    %v181 = vld [vmem:[#allocation5 + $0x8] sm:$0xff]
    %v182 = vadd.f32 %v178, %v180
    %v183 = vadd.f32 %v179, %v181
    %v184 = vsel %vm87, %v182, 0.0
    %185 = vadd.xlane.f32.xlu0 %v184
    %v186 = vpop.xlane.xlu0 %185
    %v187 = vsel %vm87, %v183, 0.0
    %188 = vadd.xlane.f32.xlu0 %v187
    %v189 = vpop.xlane.xlu0 %188
    %v190 = vmul.f32 %v186, 0.03125
    %v191 = vmul.f32 %v189, 0.03125
    %v192 = vsub.f32 %v182, %v190
    %v193 = vsub.f32 %v183, %v191
    %v194 = vmul.f32 %v192, %v192
    %v195 = vmul.f32 %v193, %v193
    %v196 = vsel %vm87, %v194, 0.0
    %197 = vadd.xlane.f32.xlu0 %v196
    %v198 = vpop.xlane.xlu0 %197
    %v199 = vsel %vm87, %v195, 0.0
    %200 = vadd.xlane.f32.xlu0 %v199
    %v201 = vpop.xlane.xlu0 %200
    %v202 = vmul.f32 %v198, 0.03125
    %v203 = vmul.f32 %v201, 0.03125
    %v204 = vadd.f32 %v202, 1e-05
    %v205 = vadd.f32 %v203, 1e-05
    %v206 = vrsqrt.pop %v204
    %v207 = vmul.f32 %v206, %v204
    %v208 = vmul.f32 %v207, %v206
    %v209 = vmul.f32 0.5, %v208
    %v210 = vsub.f32 1.5, %v209
    %v211 = vmul.f32 %v206, %v210
    %vm212 = vweird.f32 %v204
    %vm213 = vweird.f32 %v206
    %vm214 = vmor %vm212, %vm213
    %v215 = vsel %vm214, %v206, %v211
    %v216 = vrsqrt.pop %v205
    %v217 = vmul.f32 %v216, %v205
    %v218 = vmul.f32 %v217, %v216
    %v219 = vmul.f32 0.5, %v218
    %v220 = vsub.f32 1.5, %v219
    %v221 = vmul.f32 %v216, %v220
    %vm222 = vweird.f32 %v205
    %vm223 = vweird.f32 %v216
    %vm224 = vmor %vm222, %vm223
    %v225 = vsel %vm224, %v216, %v221
    %v226 = vmul.f32 %v192, %v215
    %v227 = vmul.f32 %v193, %v225
    %v228 = vld [vmem:[%s4] sm:$0x1]
    %v230 = vperm.slane %v228, 0
    %v232 = vmul.f32 %v226, %v230
    %v233 = vmul.f32 %v227, %v230
    %v234 = vld [vmem:[%s5] sm:$0x1]
    %v236 = vperm.slane %v234, 0
    %v238 = vadd.f32 %v232, %v236
    %v239 = vadd.f32 %v233, %v236
    %240 = vst.msk [vmem:[#allocation8] sm:$0xff] %vm87, %v238
    %241 = vst.msk [vmem:[#allocation8 + $0x8] sm:$0xff] %vm87, %v239
    // Predicated region
    $region38: #{tpu_custom_call.1} parent=1 // pred_check
      _
    $region39: #{tpu_custom_call.1} parent=1 // pred_check_branch
      %243 = sbr.rel (0) target = $region41
    $region40: #{tpu_custom_call.1} parent=1 // pred_region
      %245 = vsyncadd [#allocation4], 0
      %s246 = sshll.u32 [#allocation8], 4
      %s247 = int_to_ptr.vmem [resolvable:$true] %s246
      %s248 = sshll.u32 %s6, 4
      %s249 = int_to_ptr.hbm [resolvable:$true] %s248
      %254 = dma.vmem_to_hbm [thread:$0]  %s247, 256, %s249, [#allocation4], 128, 128, 8
    $region41: #{tpu_custom_call.1} parent=1 // pred_fallthru
      _
    // Predicated region
    $region42: #{tpu_custom_call.1} parent=1 // pred_check
      _
    $region43: #{tpu_custom_call.1} parent=1 // pred_check_branch
      %256 = sbr.rel (0) target = $region45
    $region44: #{tpu_custom_call.1} parent=1 // pred_region
      %258 = dma.done [#allocation4], 256
    $region45: #{tpu_custom_call.1} parent=1 // pred_fallthru
      _
    %259 = vsyncpa [#allocation3], 1
    %260 = vsyncpa [#allocation6], 1
    %261 = vsyncpa [#allocation4], 1

// kernel: tpu_custom_call.1
$region0: #{tpu_custom_call.1}
  #allocation0 [shape = 'u32[]', space=smem, size = 0x4, offset = 0x4, fixed_abs, tag = 'smem constant byte address 0x4 - core index']
  #allocation1 [shape = 'u32[72,128]{1,0:T(1,128)}', space=vmem, size = 0x9000, scoped, tag = 'internal scratch']
  %s0 = inlined_call_operand.hbm [shape: f32[16,32], index: 0, kind: input, shape index: {}]
  %s1 = inlined_call_operand.hbm [shape: f32[16,32], index: 1, kind: input, shape index: {}]
  %s2 = inlined_call_operand.hbm [shape: f32[32,256], index: 2, kind: input, shape index: {}]
  %s3 = inlined_call_operand.vmem [shape: f32[1,256], index: 3, kind: input, shape index: {}]
  %s4 = inlined_call_operand.vmem [shape: f32[1,32], index: 4, kind: input, shape index: {}]
  %s5 = inlined_call_operand.vmem [shape: f32[1,32], index: 5, kind: input, shape index: {}]
  %s6 = inlined_call_operand.hbm [shape: f32[16,32], index: 6, kind: output, shape index: {}]
  %s7 = sld [smem:[#allocation0]]
  $region46: #{tpu_custom_call.1} parent=0
    _
  %s9 = ssub.s32 1, %s7
  %s10 = scalar_select 0, %s9, %s7
  $region1: #{tpu_custom_call.1} parent=0
    #allocation2 [shape = 'u8[8192]{0}', space=vmem, size = 0x2000, scoped, tag = 'input window, operand 0, single buffered']
    #allocation3 [shape = 's32[1]{0}', space=sflag, size = 0x4, scoped, tag = 'scoped memory for tpu_custom_call.1']
    #allocation4 [shape = 's32[1]{0}', space=sflag, size = 0x4, scoped, tag = 'scoped memory for tpu_custom_call.1']
    #allocation5 [shape = 'u8[8192]{0}', space=vmem, size = 0x2000, scoped, tag = 'input window, operand 1, single buffered']
    #allocation6 [shape = 's32[1]{0}', space=sflag, size = 0x4, scoped, tag = 'scoped memory for tpu_custom_call.1']
    #allocation7 [shape = 'u8[32768]{0}', space=vmem, size = 0x8000, scoped, tag = 'input window, operand 2, single buffered']
    #allocation8 [shape = 'u8[8192]{0}', space=vmem, size = 0x2000, scoped, tag = 'output window, operand 0, single buffered']
    %11 = vsyncpa [#allocation3], 0
    %12 = vsyncpa [#allocation6], 0
    %13 = vsyncpa [#allocation4], 0
    // Predicated region
    $region2: #{tpu_custom_call.1} parent=1 // pred_check
      _
    $region3: #{tpu_custom_call.1} parent=1 // pred_check_branch
      %15 = sbr.rel (0) target = $region5
    $region4: #{tpu_custom_call.1} parent=1 // pred_region
      %17 = vsyncadd [#allocation3], 0
      %s18 = sshll.u32 %s0, 4
      %s19 = int_to_ptr.hbm [resolvable:$true] %s18
      %s20 = sshll.u32 [#allocation2], 4
      %s21 = int_to_ptr.vmem [resolvable:$true] %s20
      %26 = dma.hbm_to_vmem [thread:$0]  %s19, 256, %s21, [#allocation3], 128, 128, 8
    $region5: #{tpu_custom_call.1} parent=1 // pred_fallthru
      _
    // Predicated region
    $region6: #{tpu_custom_call.1} parent=1 // pred_check
      _
    $region7: #{tpu_custom_call.1} parent=1 // pred_check_branch
      %28 = sbr.rel (0) target = $region9
    $region8: #{tpu_custom_call.1} parent=1 // pred_region
      %30 = vsyncadd [#allocation6], 0
      %s31 = sshll.u32 %s1, 4
      %s32 = int_to_ptr.hbm [resolvable:$true] %s31
      %s33 = sshll.u32 [#allocation5], 4
      %s34 = int_to_ptr.vmem [resolvable:$true] %s33
      %39 = dma.hbm_to_vmem [thread:$0]  %s32, 256, %s34, [#allocation6], 128, 128, 8
    $region9: #{tpu_custom_call.1} parent=1 // pred_fallthru
      _
    // Predicated region
    $region10: #{tpu_custom_call.1} parent=1 // pred_check
      _
    $region11: #{tpu_custom_call.1} parent=1 // pred_check_branch
      %41 = sbr.rel (0) target = $region13
    $region12: #{tpu_custom_call.1} parent=1 // pred_region
      %43 = vsyncadd [#allocation6], 0
      %s44 = sshll.u32 %s2, 4
      %s45 = int_to_ptr.hbm [resolvable:$true] %s44
      %s46 = sshll.u32 [#allocation7], 4
      %s47 = int_to_ptr.vmem [resolvable:$true] %s46
      %52 = dma.hbm_to_vmem [thread:$0]  %s45, 1024, %s47, [#allocation6], 256, 256, 16
    $region13: #{tpu_custom_call.1} parent=1 // pred_fallthru
      _
    // Predicated region
    $region14: #{tpu_custom_call.1} parent=1 // pred_check
      _
    $region15: #{tpu_custom_call.1} parent=1 // pred_check_branch
      %54 = sbr.rel (0) target = $region17
    $region16: #{tpu_custom_call.1} parent=1 // pred_region
      _
    $region17: #{tpu_custom_call.1} parent=1 // pred_fallthru
      _
    // Predicated region
    $region18: #{tpu_custom_call.1} parent=1 // pred_check
      _
    $region19: #{tpu_custom_call.1} parent=1 // pred_check_branch
      %56 = sbr.rel (0) target = $region21
    $region20: #{tpu_custom_call.1} parent=1 // pred_region
      _
    $region21: #{tpu_custom_call.1} parent=1 // pred_fallthru
      _
    // Predicated region
    $region22: #{tpu_custom_call.1} parent=1 // pred_check
      _
    $region23: #{tpu_custom_call.1} parent=1 // pred_check_branch
      %58 = sbr.rel (0) target = $region25
    $region24: #{tpu_custom_call.1} parent=1 // pred_region
      _
    $region25: #{tpu_custom_call.1} parent=1 // pred_fallthru
      _
    // Predicated region
    $region26: #{tpu_custom_call.1} parent=1 // pred_check
      _
    $region27: #{tpu_custom_call.1} parent=1 // pred_check_branch
      %60 = sbr.rel (0) target = $region29
    $region28: #{tpu_custom_call.1} parent=1 // pred_region
      %62 = dma.done [#allocation3], 256
    $region29: #{tpu_custom_call.1} parent=1 // pred_fallthru
      _
    // Predicated region
    $region30: #{tpu_custom_call.1} parent=1 // pred_check
      _
    $region31: #{tpu_custom_call.1} parent=1 // pred_check_branch
      %64 = sbr.rel (0) target = $region33
    $region32: #{tpu_custom_call.1} parent=1 // pred_region
      %66 = dma.done [#allocation6], 256
    $region33: #{tpu_custom_call.1} parent=1 // pred_fallthru
      _
    // Predicated region
    $region34: #{tpu_custom_call.1} parent=1 // pred_check
      _
    $region35: #{tpu_custom_call.1} parent=1 // pred_check_branch
      %68 = sbr.rel (0) target = $region37
    $region36: #{tpu_custom_call.1} parent=1 // pred_region
      %70 = dma.done [#allocation6], 1024
    $region37: #{tpu_custom_call.1} parent=1 // pred_fallthru
      _
    %v71 = vld [vmem:[#allocation2] sm:$0xff]
    %v72 = vld [vmem:[#allocation2 + $0x8] sm:$0xff]
    %v73 = vld [vmem:[#allocation7] sm:$0xff]
    %v74 = vld [vmem:[#allocation7 + $0x8] sm:$0xff]
    %v75 = vld [vmem:[#allocation7 + $0x10] sm:$0xff]
    %v76 = vld [vmem:[#allocation7 + $0x18] sm:$0xff]
    %v77 = vld [vmem:[#allocation7 + $0x20] sm:$0xff]
    %v78 = vld [vmem:[#allocation7 + $0x28] sm:$0xff]
    %v79 = vld [vmem:[#allocation7 + $0x30] sm:$0xff]
    %v80 = vld [vmem:[#allocation7 + $0x38] sm:$0xff]
    %v81 = vld [vmem:[%s3] sm:$0x3]
    %v83 = vperm.slane %v81, 0
    %v84 = vperm.slane %v81, 1
    %vm87 = vcmask 261120
    %v89 = vsel %vm87, %v71, 0
    %v92 = vsel %vm87, %v72, 0
    %94 = vmatpush.msra.mxu0 0.0
    %95 = vmatpush.msra.mxu0 0.0
    %96 = vmatpush.msra.mxu0 0.0
    %97 = vmatpush.msra.mxu0 0.0
    %98 = vmatpush.msra.mxu0 0.0
    %99 = vmatpush.msra.mxu0 0.0
    %100 = vmatpush.msra.mxu0 0.0
    %101 = vmatpush.msra.mxu0 0.0
    %102 = vmatpush.msra.mxu0 0.0
    %103 = vmatpush.msra.mxu0 0.0
    %104 = vmatpush.msra.mxu0 0.0
    %105 = vmatpush.msra.mxu0 0.0
    %106 = vmatpush.msra.mxu0 %v79
    %107 = vmatpush.msra.mxu0 %v77
    %108 = vmatpush.msra.mxu0 %v75
    %109 = vmatpush.msra.mxu0 %v73
    %110 = vmatmul.f32.gmra.mxu0 %v89
    %v111 = vpop.f32.mrf.mxu0
    %v112 = vadd.f32 %v83, %v111
    %113 = vmatmul.f32.gmra.mxu0 %v92
    %v114 = vpop.f32.mrf.mxu0
    %v115 = vadd.f32 %v83, %v114
    %116 = vdwg.mxu0
    %117 = vmatpush.msra.mxu0 0.0
    %118 = vmatpush.msra.mxu0 0.0
    %119 = vmatpush.msra.mxu0 0.0
    %120 = vmatpush.msra.mxu0 0.0
    %121 = vmatpush.msra.mxu0 0.0
    %122 = vmatpush.msra.mxu0 0.0
    %123 = vmatpush.msra.mxu0 0.0
    %124 = vmatpush.msra.mxu0 0.0
    %125 = vmatpush.msra.mxu0 0.0
    %126 = vmatpush.msra.mxu0 0.0
    %127 = vmatpush.msra.mxu0 0.0
    %128 = vmatpush.msra.mxu0 0.0
    %129 = vmatpush.msra.mxu0 %v80
    %130 = vmatpush.msra.mxu0 %v78
    %131 = vmatpush.msra.mxu0 %v76
    %132 = vmatpush.msra.mxu0 %v74
    %133 = vmatmul.f32.gmra.mxu0 %v89
    %v134 = vpop.f32.mrf.mxu0
    %v135 = vadd.f32 %v84, %v134
    %136 = vmatmul.f32.gmra.mxu0 %v92
    %v137 = vpop.f32.mrf.mxu0
    %v138 = vadd.f32 %v84, %v137
    %139 = vdwg.mxu0
    %v140 = vxor.u32 %v135, 2147483648
    %v141 = vxor.u32 %v138, 2147483648
    %v142 = vmul.f32 %v140, 1.442695
    %v143 = vpow.pop %v142
    %v144 = vmul.f32 %v141, 1.442695
    %v145 = vpow.pop %v144
    %v146 = vadd.f32 %v143, 1.0
    %v147 = vadd.f32 %v145, 1.0
    %v148 = vrcp.pop %v146
    %v149 = vmul.f32 %v146, %v148
    %v150 = vsub.f32 1.0, %v149
    %v151 = vmul.f32 %v148, %v150
    %v152 = vadd.f32 %v148, %v151
    %vm153 = vweird.f32 %v146
    %vm154 = vweird.f32 %v148
    %vm155 = vmor %vm153, %vm154
    %v156 = vsel %vm155, %v148, %v152
    %v157 = vand.u32 2147483647, %v146
    %vm158 = vcmp.eq.f32.partialorder %v157, 8.507059e+37
    %v159 = vand.u32 %v146, 2147483648
    %v160 = vor.u32 1.1754944e-38, %v159
    %v161 = vsel %vm158, %v160, %v156
    %v162 = vmul.f32 1.0, %v161
    %v163 = vrcp.pop %v147
    %v164 = vmul.f32 %v147, %v163
    %v165 = vsub.f32 1.0, %v164
    %v166 = vmul.f32 %v163, %v165
    %v167 = vadd.f32 %v163, %v166
    %vm168 = vweird.f32 %v147
    %vm169 = vweird.f32 %v163
    %vm170 = vmor %vm168, %vm169
    %v171 = vsel %vm170, %v163, %v167
    %v172 = vand.u32 2147483647, %v147
    %vm173 = vcmp.eq.f32.partialorder %v172, 8.507059e+37
    %v174 = vand.u32 %v147, 2147483648
    %v175 = vor.u32 1.1754944e-38, %v174
    %v176 = vsel %vm173, %v175, %v171
    %v177 = vmul.f32 1.0, %v176
    %v178 = vmul.f32 %v112, %v162
    %v179 = vmul.f32 %v115, %v177
    %v180 = vld [vmem:[#allocation5] sm:$0xff]
    %v181 = vld [vmem:[#allocation5 + $0x8] sm:$0xff]
    %v182 = vadd.f32 %v178, %v180
    %v183 = vadd.f32 %v179, %v181
    %v184 = vsel %vm87, %v182, 0.0
    %185 = vadd.xlane.f32.xlu0 %v184
    %v186 = vpop.xlane.xlu0 %185
    %v187 = vsel %vm87, %v183, 0.0
    %188 = vadd.xlane.f32.xlu0 %v187
    %v189 = vpop.xlane.xlu0 %188
    %v190 = vmul.f32 %v186, 0.03125
    %v191 = vmul.f32 %v189, 0.03125
    %v192 = vsub.f32 %v182, %v190
    %v193 = vsub.f32 %v183, %v191
    %v194 = vmul.f32 %v192, %v192
    %v195 = vmul.f32 %v193, %v193
    %v196 = vsel %vm87, %v194, 0.0
    %197 = vadd.xlane.f32.xlu0 %v196
    %v198 = vpop.xlane.xlu0 %197
    %v199 = vsel %vm87, %v195, 0.0
    %200 = vadd.xlane.f32.xlu0 %v199
    %v201 = vpop.xlane.xlu0 %200
    %v202 = vmul.f32 %v198, 0.03125
    %v203 = vmul.f32 %v201, 0.03125
    %v204 = vadd.f32 %v202, 1e-05
    %v205 = vadd.f32 %v203, 1e-05
    %v206 = vrsqrt.pop %v204
    %v207 = vmul.f32 %v206, %v204
    %v208 = vmul.f32 %v207, %v206
    %v209 = vmul.f32 0.5, %v208
    %v210 = vsub.f32 1.5, %v209
    %v211 = vmul.f32 %v206, %v210
    %vm212 = vweird.f32 %v204
    %vm213 = vweird.f32 %v206
    %vm214 = vmor %vm212, %vm213
    %v215 = vsel %vm214, %v206, %v211
    %v216 = vrsqrt.pop %v205
    %v217 = vmul.f32 %v216, %v205
    %v218 = vmul.f32 %v217, %v216
    %v219 = vmul.f32 0.5, %v218
    %v220 = vsub.f32 1.5, %v219
    %v221 = vmul.f32 %v216, %v220
    %vm222 = vweird.f32 %v205
    %vm223 = vweird.f32 %v216
    %vm224 = vmor %vm222, %vm223
    %v225 = vsel %vm224, %v216, %v221
    %v226 = vmul.f32 %v192, %v215
    %v227 = vmul.f32 %v193, %v225
    %v228 = vld [vmem:[%s4] sm:$0x1]
    %v230 = vperm.slane %v228, 0
    %v232 = vmul.f32 %v226, %v230
    %v233 = vmul.f32 %v227, %v230
    %v234 = vld [vmem:[%s5] sm:$0x1]
    %v236 = vperm.slane %v234, 0
    %v238 = vadd.f32 %v232, %v236
    %v239 = vadd.f32 %v233, %v236
    %240 = vst.msk [vmem:[#allocation8] sm:$0xff] %vm87, %v238
    %241 = vst.msk [vmem:[#allocation8 + $0x8] sm:$0xff] %vm87, %v239
    // Predicated region
    $region38: #{tpu_custom_call.1} parent=1 // pred_check
      _
    $region39: #{tpu_custom_call.1} parent=1 // pred_check_branch
      %243 = sbr.rel (0) target = $region41
    $region40: #{tpu_custom_call.1} parent=1 // pred_region
      %245 = vsyncadd [#allocation4], 0
      %s246 = sshll.u32 [#allocation8], 4
      %s247 = int_to_ptr.vmem [resolvable:$true] %s246
      %s248 = sshll.u32 %s6, 4
      %s249 = int_to_ptr.hbm [resolvable:$true] %s248
      %254 = dma.vmem_to_hbm [thread:$0]  %s247, 256, %s249, [#allocation4], 128, 128, 8
    $region41: #{tpu_custom_call.1} parent=1 // pred_fallthru
      _
    // Predicated region
    $region42: #{tpu_custom_call.1} parent=1 // pred_check
      _
    $region43: #{tpu_custom_call.1} parent=1 // pred_check_branch
      %256 = sbr.rel (0) target = $region45
    $region44: #{tpu_custom_call.1} parent=1 // pred_region
      %258 = dma.done [#allocation4], 256
    $region45: #{tpu_custom_call.1} parent=1 // pred_fallthru
      _
    %259 = vsyncpa [#allocation3], 1
    %260 = vsyncpa [#allocation6], 1
    %261 = vsyncpa [#allocation4], 1

</llo_original>
